<compile_context>
chip_gen: v7x
topology: tpu7x:2x2x1
jax: 0.10.0
libtpu: 0.0.40
codegen_flags: <defaults>
</compile_context>

<pallas_src>
import jax
import jax.numpy as jnp
from jax.experimental import pallas as pl
from jax.experimental.pallas import tpu as pltpu

INPUT_DIM1 = 32   # encoder input width
INPUT_DIM2 = 44   # ann input width (encoder out 32 + tail 12)
HIDDEN1 = 32
HIDDEN2 = 32
OUT1 = 32
OUT2 = 12
TAIL = INPUT_DIM2 - INPUT_DIM1  # 12


def _pgann_kernel(x_ref,                                   # [44, tn]  X^T tile
                  w1_ref, w2_ref,                          # encoder   [32,32] each
                  w3a_ref, w3b_ref,                        # ann.0 split [32,32], [32,12]
                  w4_ref, w5_ref,                          # ann.2 [32,32], ann.4 [12,32]
                  bias_ref,                                # packed biases [32, 8] f32
                  o_ref):                                  # [12, tn]  output tile
    wdt = w1_ref.dtype

    # Sublane-aligned split (row 32 is a multiple of 8 -> free view).
    x_enc = x_ref[:INPUT_DIM1, :]     # [32, tn]
    x_tail = x_ref[INPUT_DIM1:, :]    # [12, tn]

    # Packed bias columns (kept in f32 for the VPU epilogue; v5e-safe).
    b1 = bias_ref[:, 0:1]
    b2 = bias_ref[:, 1:2]
    b3 = bias_ref[:, 2:3]
    b4 = bias_ref[:, 3:4]
    b5 = bias_ref[:OUT2, 4:5]

    # encoder
    h1 = jnp.maximum(
        jnp.dot(w1_ref[...], x_enc, preferred_element_type=jnp.float32) + b1, 0.0)
    enc = jnp.maximum(
        jnp.dot(w2_ref[...], h1.astype(wdt),
                preferred_element_type=jnp.float32) + b2, 0.0)

    # ann layer 1: W3 @ concat([enc, tail]) == W3a @ enc + W3b @ tail
    a1 = jnp.maximum(
        jnp.dot(w3a_ref[...], enc.astype(wdt), preferred_element_type=jnp.float32)
        + jnp.dot(w3b_ref[...], x_tail, preferred_element_type=jnp.float32)
        + b3, 0.0)

    # ann layer 2
    a2 = jnp.maximum(
        jnp.dot(w4_ref[...], a1.astype(wdt),
                preferred_element_type=jnp.float32) + b4, 0.0)

    # ann layer 3 (no activation)
    out = jnp.dot(w5_ref[...], a2.astype(wdt),
                  preferred_element_type=jnp.float32) + b5
    o_ref[...] = out.astype(o_ref.dtype)


def pgann_forward(x, params, *, tn=512, use_bf16=True):
    """x: [N, 44] float32. Returns [N, 12] float32.

    tn: lane tile (samples per grid step); clamped to a multiple of 128 and
        to the padded problem size.  For large N prefer 512-4096 and keep the
        resulting grid length >= 2 so both v7x TensorCores get work.
    use_bf16: cast x / weights to bf16 for the MXU (f32 accumulation and f32
        bias/ReLU epilogue are kept).
    """
    N, F = x.shape
    assert F == INPUT_DIM2

    (w1, b1, w2, b2, w3, b3, w4, b4, w5, b5) = params

    # Weights as [out, in]; split ann.0 weight along its input dim.
    cdtype = jnp.bfloat16 if use_bf16 else jnp.float32
    ws = [w.astype(cdtype) for w in (
        w1.T,                       # [32, 32]
        w2.T,                       # [32, 32]
        w3[:INPUT_DIM1, :].T,       # W3a^T [32, 32]
        w3[INPUT_DIM1:, :].T,       # W3b^T [32, 12]
        w4.T,                       # [32, 32]
        w5.T,                       # [12, 32]
    )]

    # Pack all biases into one small resident f32 array (one operand, one DMA).
    bias_pack = jnp.zeros((HIDDEN1, 8), jnp.float32)
    for j, b in enumerate((b1, b2, b3, b4)):
        bias_pack = bias_pack.at[:, j].set(b)
    bias_pack = bias_pack.at[:OUT2, 4].set(b5)

    # Lane tile: multiple of 128, no bigger than the padded problem.
    tn_eff = min(tn, pl.cdiv(N, 128) * 128)
    tn_eff = max(128, (tn_eff // 128) * 128)
    n_pad = pl.cdiv(N, tn_eff) * tn_eff

    # Batch-on-lanes layout: X^T [44, n_pad], zero-padded along lanes.
    xt = jnp.pad(x.T, ((0, 0), (0, n_pad - N))).astype(cdtype)

    def rep(shape):
        # whole-array resident block, same for every grid step
        return pl.BlockSpec(shape, lambda i: (0, 0))

    grid = (n_pad // tn_eff,)
    out_t = pl.pallas_call(
        _pgann_kernel,
        out_shape=jax.ShapeDtypeStruct((OUT2, n_pad), jnp.float32),
        grid_spec=pltpu.PrefetchScalarGridSpec(
            num_scalar_prefetch=0,
            grid=grid,
            in_specs=[pl.BlockSpec((INPUT_DIM2, tn_eff), lambda i: (0, i))]
                     + [rep(w.shape) for w in ws]
                     + [rep(bias_pack.shape)],
            out_specs=pl.BlockSpec((OUT2, tn_eff), lambda i: (0, i)),
        ),
        compiler_params=pltpu.CompilerParams(
            dimension_semantics=("parallel",)),
    )(xt, *ws, bias_pack)

    return out_t[:, :N].T


def init_params(key):
    """Deterministic synthetic parameters; weights stored as [in, out]."""
    ks = jax.random.split(key, 10)

    def lin(kw, kb, fan_in, fan_out):
        bound = 1.0 / jnp.sqrt(fan_in)
        w = jax.random.uniform(kw, (fan_in, fan_out), jnp.float32, -bound, bound)
        b = jax.random.uniform(kb, (fan_out,), jnp.float32, -bound, bound)
        return w, b

    w1, b1 = lin(ks[0], ks[1], INPUT_DIM1, HIDDEN1)   # encoder.0
    w2, b2 = lin(ks[2], ks[3], HIDDEN1, OUT1)         # encoder.2
    w3, b3 = lin(ks[4], ks[5], INPUT_DIM2, HIDDEN2)   # ann.0
    w4, b4 = lin(ks[6], ks[7], HIDDEN2, HIDDEN2)      # ann.2
    w5, b5 = lin(ks[8], ks[9], HIDDEN2, OUT2)         # ann.4
    return (w1, b1, w2, b2, w3, b3, w4, b4, w5, b5)


def pgann_reference(x, params):
    """Plain-JAX reference mirroring the PyTorch forward (for sanity check)."""
    (w1, b1, w2, b2, w3, b3, w4, b4, w5, b5) = params
    h = jnp.maximum(x[:, :INPUT_DIM1] @ w1 + b1, 0.0)
    enc = jnp.maximum(h @ w2 + b2, 0.0)
    xc = jnp.concatenate([enc, x[:, INPUT_DIM1:]], axis=1)
    a = jnp.maximum(xc @ w3 + b3, 0.0)
    a = jnp.maximum(a @ w4 + b4, 0.0)
    return a @ w5 + b5


if __name__ == "__main__":
    key = jax.random.PRNGKey(0)
    kx, kp, ke = jax.random.split(key, 3)

    N = 16                                # number of nodes / samples
    x = jax.random.normal(kx, (N, INPUT_DIM2), jnp.float32)
    # edge_index is unused by the forward pass (kept for API parity).
    edge_index = jax.random.randint(ke, (2, 32), 0, N, jnp.int32)

    params = init_params(kp)
    ref = pgann_reference(x, params)

    # f32 path: bit-for-bit-level agreement with the reference.
    out_f32 = jax.block_until_ready(pgann_forward(x, params, use_bf16=False))
    assert out_f32.shape == (N, OUT2)
    assert jnp.allclose(out_f32, ref, atol=1e-5, rtol=1e-5)

    # bf16 MXU path (f32 accumulation + f32 epilogue): looser tolerance.
    out_bf16 = jax.block_until_ready(pgann_forward(x, params, use_bf16=True))
    assert out_bf16.shape == (N, OUT2)
    assert jnp.allclose(out_bf16, ref, atol=5e-2, rtol=5e-2)

    print("KERNEL_OK")
</pallas_src>

<mosaic_0001>
module attributes {stable_mosaic.version = 11 : i64} {
  func.func @_pgann_kernel(%arg0: i32, %arg1: memref<44x128xf32, #tpu.memory_space<vmem>>, %arg2: memref<32x32xf32, #tpu.memory_space<vmem>>, %arg3: memref<32x32xf32, #tpu.memory_space<vmem>>, %arg4: memref<32x32xf32, #tpu.memory_space<vmem>>, %arg5: memref<32x12xf32, #tpu.memory_space<vmem>>, %arg6: memref<32x32xf32, #tpu.memory_space<vmem>>, %arg7: memref<12x32xf32, #tpu.memory_space<vmem>>, %arg8: memref<32x8xf32, #tpu.memory_space<vmem>>, %arg9: memref<12x128xf32, #tpu.memory_space<vmem>>) attributes {dimension_semantics = [#tpu.dimension_semantics<parallel>], iteration_bounds = array<i64: 1>, scalar_prefetch = 0 : i64, scratch_operands = 0 : i64, tpu.core_type = #tpu.core_type<tc>, window_params = [{transform_indices = @transform_0, window_bounds = array<i64: 44, 128>}, {pipeline_mode = #tpu.pipeline_mode<synchronous>, transform_indices = @transform_1, window_bounds = array<i64: 32, 32>}, {pipeline_mode = #tpu.pipeline_mode<synchronous>, transform_indices = @transform_2, window_bounds = array<i64: 32, 32>}, {pipeline_mode = #tpu.pipeline_mode<synchronous>, transform_indices = @transform_3, window_bounds = array<i64: 32, 32>}, {pipeline_mode = #tpu.pipeline_mode<synchronous>, transform_indices = @transform_4, window_bounds = array<i64: 32, 12>}, {pipeline_mode = #tpu.pipeline_mode<synchronous>, transform_indices = @transform_5, window_bounds = array<i64: 32, 32>}, {pipeline_mode = #tpu.pipeline_mode<synchronous>, transform_indices = @transform_6, window_bounds = array<i64: 12, 32>}, {pipeline_mode = #tpu.pipeline_mode<synchronous>, transform_indices = @transform_7, window_bounds = array<i64: 32, 8>}, {transform_indices = @transform_8, window_bounds = array<i64: 12, 128>}]} {
    %c0 = arith.constant 0 : index
    %c0_0 = arith.constant 0 : index
    %0 = vector.load %arg1[%c0, %c0_0] : memref<44x128xf32, #tpu.memory_space<vmem>>, vector<32x128xf32>
    %c32 = arith.constant 32 : index
    %c0_1 = arith.constant 0 : index
    %1 = vector.load %arg1[%c32, %c0_1] : memref<44x128xf32, #tpu.memory_space<vmem>>, vector<12x128xf32>
    %c0_2 = arith.constant 0 : index
    %c0_3 = arith.constant 0 : index
    %2 = vector.load %arg8[%c0_2, %c0_3] : memref<32x8xf32, #tpu.memory_space<vmem>>, vector<32x1xf32>
    %c0_4 = arith.constant 0 : index
    %c1 = arith.constant 1 : index
    %3 = vector.load %arg8[%c0_4, %c1] : memref<32x8xf32, #tpu.memory_space<vmem>>, vector<32x1xf32>
    %c0_5 = arith.constant 0 : index
    %c2 = arith.constant 2 : index
    %4 = vector.load %arg8[%c0_5, %c2] : memref<32x8xf32, #tpu.memory_space<vmem>>, vector<32x1xf32>
    %c0_6 = arith.constant 0 : index
    %c3 = arith.constant 3 : index
    %5 = vector.load %arg8[%c0_6, %c3] : memref<32x8xf32, #tpu.memory_space<vmem>>, vector<32x1xf32>
    %c0_7 = arith.constant 0 : index
    %c4 = arith.constant 4 : index
    %6 = vector.load %arg8[%c0_7, %c4] : memref<32x8xf32, #tpu.memory_space<vmem>>, vector<12x1xf32>
    %c0_8 = arith.constant 0 : index
    %c0_9 = arith.constant 0 : index
    %7 = vector.load %arg2[%c0_8, %c0_9] : memref<32x32xf32, #tpu.memory_space<vmem>>, vector<32x32xf32>
    %cst = arith.constant dense<0.000000e+00> : vector<32x128xf32>
    %8 = tpu.matmul %7, %0, %cst {dimension_numbers = #tpu.dot_dimension_numbers<[1], [0], [0], [1], [0, 0, 1, 1], [], []>} : vector<32x32xf32>, vector<32x128xf32>, vector<32x128xf32> -> vector<32x128xf32>
    %9 = vector.broadcast %2 : vector<32x1xf32> to vector<32x128xf32>
    %10 = arith.addf %8, %9 : vector<32x128xf32>
    %cst_10 = arith.constant 0.000000e+00 : f32
    %11 = vector.broadcast %cst_10 : f32 to vector<32x128xf32>
    %12 = arith.maximumf %10, %11 : vector<32x128xf32>
    %c0_11 = arith.constant 0 : index
    %c0_12 = arith.constant 0 : index
    %13 = vector.load %arg3[%c0_11, %c0_12] : memref<32x32xf32, #tpu.memory_space<vmem>>, vector<32x32xf32>
    %cst_13 = arith.constant dense<0.000000e+00> : vector<32x128xf32>
    %14 = tpu.matmul %13, %12, %cst_13 {dimension_numbers = #tpu.dot_dimension_numbers<[1], [0], [0], [1], [0, 0, 1, 1], [], []>} : vector<32x32xf32>, vector<32x128xf32>, vector<32x128xf32> -> vector<32x128xf32>
    %15 = vector.broadcast %3 : vector<32x1xf32> to vector<32x128xf32>
    %16 = arith.addf %14, %15 : vector<32x128xf32>
    %cst_14 = arith.constant 0.000000e+00 : f32
    %17 = vector.broadcast %cst_14 : f32 to vector<32x128xf32>
    %18 = arith.maximumf %16, %17 : vector<32x128xf32>
    %c0_15 = arith.constant 0 : index
    %c0_16 = arith.constant 0 : index
    %19 = vector.load %arg4[%c0_15, %c0_16] : memref<32x32xf32, #tpu.memory_space<vmem>>, vector<32x32xf32>
    %cst_17 = arith.constant dense<0.000000e+00> : vector<32x128xf32>
    %20 = tpu.matmul %19, %18, %cst_17 {dimension_numbers = #tpu.dot_dimension_numbers<[1], [0], [0], [1], [0, 0, 1, 1], [], []>} : vector<32x32xf32>, vector<32x128xf32>, vector<32x128xf32> -> vector<32x128xf32>
    %c0_18 = arith.constant 0 : index
    %c0_19 = arith.constant 0 : index
    %21 = vector.load %arg5[%c0_18, %c0_19] : memref<32x12xf32, #tpu.memory_space<vmem>>, vector<32x12xf32>
    %cst_20 = arith.constant dense<0.000000e+00> : vector<32x128xf32>
    %22 = tpu.matmul %21, %1, %cst_20 {dimension_numbers = #tpu.dot_dimension_numbers<[1], [0], [0], [1], [0, 0, 1, 1], [], []>} : vector<32x12xf32>, vector<12x128xf32>, vector<32x128xf32> -> vector<32x128xf32>
    %23 = arith.addf %20, %22 : vector<32x128xf32>
    %24 = vector.broadcast %4 : vector<32x1xf32> to vector<32x128xf32>
    %25 = arith.addf %23, %24 : vector<32x128xf32>
    %cst_21 = arith.constant 0.000000e+00 : f32
    %26 = vector.broadcast %cst_21 : f32 to vector<32x128xf32>
    %27 = arith.maximumf %25, %26 : vector<32x128xf32>
    %c0_22 = arith.constant 0 : index
    %c0_23 = arith.constant 0 : index
    %28 = vector.load %arg6[%c0_22, %c0_23] : memref<32x32xf32, #tpu.memory_space<vmem>>, vector<32x32xf32>
    %cst_24 = arith.constant dense<0.000000e+00> : vector<32x128xf32>
    %29 = tpu.matmul %28, %27, %cst_24 {dimension_numbers = #tpu.dot_dimension_numbers<[1], [0], [0], [1], [0, 0, 1, 1], [], []>} : vector<32x32xf32>, vector<32x128xf32>, vector<32x128xf32> -> vector<32x128xf32>
    %30 = vector.broadcast %5 : vector<32x1xf32> to vector<32x128xf32>
    %31 = arith.addf %29, %30 : vector<32x128xf32>
    %cst_25 = arith.constant 0.000000e+00 : f32
    %32 = vector.broadcast %cst_25 : f32 to vector<32x128xf32>
    %33 = arith.maximumf %31, %32 : vector<32x128xf32>
    %c0_26 = arith.constant 0 : index
    %c0_27 = arith.constant 0 : index
    %34 = vector.load %arg7[%c0_26, %c0_27] : memref<12x32xf32, #tpu.memory_space<vmem>>, vector<12x32xf32>
    %cst_28 = arith.constant dense<0.000000e+00> : vector<12x128xf32>
    %35 = tpu.matmul %34, %33, %cst_28 {dimension_numbers = #tpu.dot_dimension_numbers<[1], [0], [0], [1], [0, 0, 1, 1], [], []>} : vector<12x32xf32>, vector<32x128xf32>, vector<12x128xf32> -> vector<12x128xf32>
    %36 = vector.broadcast %6 : vector<12x1xf32> to vector<12x128xf32>
    %37 = arith.addf %35, %36 : vector<12x128xf32>
    %c0_29 = arith.constant 0 : index
    %c0_30 = arith.constant 0 : index
    %38 = vector.load %arg9[%c0_29, %c0_30] : memref<12x128xf32, #tpu.memory_space<vmem>>, vector<12x128xf32>
    tpu.vector_store %arg9[%c0_29, %c0_30], %37 {strides = array<i32>} : memref<12x128xf32, #tpu.memory_space<vmem>>, vector<12x128xf32>,
    return
  }
  func.func @transform_0(%arg0: i32) -> (i32, i32) {
    %c0_i32 = arith.constant 0 : i32
    %c0_i32_0 = arith.constant 0 : i32
    return %c0_i32, %arg0 : i32, i32
  }
  func.func @transform_1(%arg0: i32) -> (i32, i32) {
    %c0_i32 = arith.constant 0 : i32
    %c0_i32_0 = arith.constant 0 : i32
    %c0_i32_1 = arith.constant 0 : i32
    return %c0_i32, %c0_i32_0 : i32, i32
  }
  func.func @transform_2(%arg0: i32) -> (i32, i32) {
    %c0_i32 = arith.constant 0 : i32
    %c0_i32_0 = arith.constant 0 : i32
    %c0_i32_1 = arith.constant 0 : i32
    return %c0_i32, %c0_i32_0 : i32, i32
  }
  func.func @transform_3(%arg0: i32) -> (i32, i32) {
    %c0_i32 = arith.constant 0 : i32
    %c0_i32_0 = arith.constant 0 : i32
    %c0_i32_1 = arith.constant 0 : i32
    return %c0_i32, %c0_i32_0 : i32, i32
  }
  func.func @transform_4(%arg0: i32) -> (i32, i32) {
    %c0_i32 = arith.constant 0 : i32
    %c0_i32_0 = arith.constant 0 : i32
    %c0_i32_1 = arith.constant 0 : i32
    return %c0_i32, %c0_i32_0 : i32, i32
  }
  func.func @transform_5(%arg0: i32) -> (i32, i32) {
    %c0_i32 = arith.constant 0 : i32
    %c0_i32_0 = arith.constant 0 : i32
    %c0_i32_1 = arith.constant 0 : i32
    return %c0_i32, %c0_i32_0 : i32, i32
  }
  func.func @transform_6(%arg0: i32) -> (i32, i32) {
    %c0_i32 = arith.constant 0 : i32
    %c0_i32_0 = arith.constant 0 : i32
    %c0_i32_1 = arith.constant 0 : i32
    return %c0_i32, %c0_i32_0 : i32, i32
  }
  func.func @transform_7(%arg0: i32) -> (i32, i32) {
    %c0_i32 = arith.constant 0 : i32
    %c0_i32_0 = arith.constant 0 : i32
    %c0_i32_1 = arith.constant 0 : i32
    return %c0_i32, %c0_i32_0 : i32, i32
  }
  func.func @transform_8(%arg0: i32) -> (i32, i32) {
    %c0_i32 = arith.constant 0 : i32
    %c0_i32_0 = arith.constant 0 : i32
    return %c0_i32, %arg0 : i32, i32
  }
}

</mosaic_0001>

<llo_original>
// kernel: tpu_custom_call.1
$region0: #{tpu_custom_call.1}
  #allocation0 [shape = 'u32[]', space=smem, size = 0x4, offset = 0x4, fixed_abs, tag = 'smem constant byte address 0x4 - core index']
  #allocation1 [shape = 'u32[144,128]{1,0:T(1,128)}', space=vmem, size = 0x12000, scoped, tag = 'internal scratch']
  %s0 = inlined_call_operand.vmem [shape: f32[44,128], index: 0, kind: input, shape index: {}]
  %s1 = inlined_call_operand.vmem [shape: f32[32,32], index: 1, kind: input, shape index: {}]
  %s2 = inlined_call_operand.hbm [shape: f32[32,32], index: 2, kind: input, shape index: {}]
  %s3 = inlined_call_operand.hbm [shape: f32[32,32], index: 3, kind: input, shape index: {}]
  %s4 = inlined_call_operand.vmem [shape: f32[32,12], index: 4, kind: input, shape index: {}]
  %s5 = inlined_call_operand.hbm [shape: f32[32,32], index: 5, kind: input, shape index: {}]
  %s6 = inlined_call_operand.vmem [shape: f32[12,32], index: 6, kind: input, shape index: {}]
  %s7 = inlined_call_operand.vmem [shape: f32[32,8], index: 7, kind: input, shape index: {}]
  %s8 = inlined_call_operand.hbm [shape: f32[12,128], index: 8, kind: output, shape index: {}]
  %s9 = sld [smem:[#allocation0]]
  $region54: #{tpu_custom_call.1} parent=0
    _
  %s11 = ssub.s32 1, %s9
  %s12 = scalar_select 0, %s11, %s9
  $region1: #{tpu_custom_call.1} parent=0
    #allocation2 [shape = 'u8[16384]{0}', space=vmem, size = 0x4000, scoped, tag = 'input window, operand 2, single buffered']
    #allocation3 [shape = 's32[1]{0}', space=sflag, size = 0x4, scoped, tag = 'scoped memory for tpu_custom_call.1']
    #allocation4 [shape = 's32[1]{0}', space=sflag, size = 0x4, scoped, tag = 'scoped memory for tpu_custom_call.1']
    #allocation5 [shape = 'u8[16384]{0}', space=vmem, size = 0x4000, scoped, tag = 'input window, operand 3, single buffered']
    #allocation6 [shape = 's32[1]{0}', space=sflag, size = 0x4, scoped, tag = 'scoped memory for tpu_custom_call.1']
    #allocation7 [shape = 'u8[16384]{0}', space=vmem, size = 0x4000, scoped, tag = 'input window, operand 5, single buffered']
    #allocation8 [shape = 'u8[8192]{0}', space=vmem, size = 0x2000, scoped, tag = 'output window, operand 0, single buffered']
    %13 = vsyncpa [#allocation3], 0
    %14 = vsyncpa [#allocation6], 0
    %15 = vsyncpa [#allocation4], 0
    // Predicated region
    $region2: #{tpu_custom_call.1} parent=1 // pred_check
      _
    $region3: #{tpu_custom_call.1} parent=1 // pred_check_branch
      %17 = sbr.rel (0) target = $region5
    $region4: #{tpu_custom_call.1} parent=1 // pred_region
      _
    $region5: #{tpu_custom_call.1} parent=1 // pred_fallthru
      _
    // Predicated region
    $region6: #{tpu_custom_call.1} parent=1 // pred_check
      _
    $region7: #{tpu_custom_call.1} parent=1 // pred_check_branch
      %19 = sbr.rel (0) target = $region9
    $region8: #{tpu_custom_call.1} parent=1 // pred_region
      _
    $region9: #{tpu_custom_call.1} parent=1 // pred_fallthru
      _
    // Predicated region
    $region10: #{tpu_custom_call.1} parent=1 // pred_check
      _
    $region11: #{tpu_custom_call.1} parent=1 // pred_check_branch
      %21 = sbr.rel (0) target = $region13
    $region12: #{tpu_custom_call.1} parent=1 // pred_region
      %s23 = ssub.s32 512, 512
      %24 = vsyncadd [#allocation3], %s23
      %s25 = sshll.u32 [#allocation2], 4
      %s26 = int_to_ptr.vmem [resolvable:$true] %s25
      %31 = dma.hbm_to_vmem [thread:$0]  %s2, 512, %s26, [#allocation3], 128, 128, 8
    $region13: #{tpu_custom_call.1} parent=1 // pred_fallthru
      _
    // Predicated region
    $region14: #{tpu_custom_call.1} parent=1 // pred_check
      _
    $region15: #{tpu_custom_call.1} parent=1 // pred_check_branch
      %33 = sbr.rel (0) target = $region17
    $region16: #{tpu_custom_call.1} parent=1 // pred_region
      %s35 = ssub.s32 512, 512
      %36 = vsyncadd [#allocation6], %s35
      %s37 = sshll.u32 [#allocation5], 4
      %s38 = int_to_ptr.vmem [resolvable:$true] %s37
      %43 = dma.hbm_to_vmem [thread:$0]  %s3, 512, %s38, [#allocation6], 128, 128, 8
    $region17: #{tpu_custom_call.1} parent=1 // pred_fallthru
      _
    // Predicated region
    $region18: #{tpu_custom_call.1} parent=1 // pred_check
      _
    $region19: #{tpu_custom_call.1} parent=1 // pred_check_branch
      %45 = sbr.rel (0) target = $region21
    $region20: #{tpu_custom_call.1} parent=1 // pred_region
      _
    $region21: #{tpu_custom_call.1} parent=1 // pred_fallthru
      _
    // Predicated region
    $region22: #{tpu_custom_call.1} parent=1 // pred_check
      _
    $region23: #{tpu_custom_call.1} parent=1 // pred_check_branch
      %47 = sbr.rel (0) target = $region25
    $region24: #{tpu_custom_call.1} parent=1 // pred_region
      %s49 = ssub.s32 512, 512
      %50 = vsyncadd [#allocation6], %s49
      %s51 = sshll.u32 [#allocation7], 4
      %s52 = int_to_ptr.vmem [resolvable:$true] %s51
      %57 = dma.hbm_to_vmem [thread:$0]  %s5, 512, %s52, [#allocation6], 128, 128, 8
    $region25: #{tpu_custom_call.1} parent=1 // pred_fallthru
      _
    // Predicated region
    $region26: #{tpu_custom_call.1} parent=1 // pred_check
      _
    $region27: #{tpu_custom_call.1} parent=1 // pred_check_branch
      %59 = sbr.rel (0) target = $region29
    $region28: #{tpu_custom_call.1} parent=1 // pred_region
      _
    $region29: #{tpu_custom_call.1} parent=1 // pred_fallthru
      _
    // Predicated region
    $region30: #{tpu_custom_call.1} parent=1 // pred_check
      _
    $region31: #{tpu_custom_call.1} parent=1 // pred_check_branch
      %61 = sbr.rel (0) target = $region33
    $region32: #{tpu_custom_call.1} parent=1 // pred_region
      _
    $region33: #{tpu_custom_call.1} parent=1 // pred_fallthru
      _
    // Predicated region
    $region34: #{tpu_custom_call.1} parent=1 // pred_check
      _
    $region35: #{tpu_custom_call.1} parent=1 // pred_check_branch
      %63 = sbr.rel (0) target = $region37
    $region36: #{tpu_custom_call.1} parent=1 // pred_region
      %64 = dma.done [#allocation3], 512
    $region37: #{tpu_custom_call.1} parent=1 // pred_fallthru
      _
    // Predicated region
    $region38: #{tpu_custom_call.1} parent=1 // pred_check
      _
    $region39: #{tpu_custom_call.1} parent=1 // pred_check_branch
      %66 = sbr.rel (0) target = $region41
    $region40: #{tpu_custom_call.1} parent=1 // pred_region
      %67 = dma.done [#allocation6], 512
    $region41: #{tpu_custom_call.1} parent=1 // pred_fallthru
      _
    // Predicated region
    $region42: #{tpu_custom_call.1} parent=1 // pred_check
      _
    $region43: #{tpu_custom_call.1} parent=1 // pred_check_branch
      %69 = sbr.rel (0) target = $region45
    $region44: #{tpu_custom_call.1} parent=1 // pred_region
      %70 = dma.done [#allocation6], 512
    $region45: #{tpu_custom_call.1} parent=1 // pred_fallthru
      _
    %v71 = vld [vmem:[%s0] sm:$0xff]
    %v72 = vld [vmem:[%s0 + $0x8] sm:$0xff]
    %v73 = vld [vmem:[%s0 + $0x10] sm:$0xff]
    %v74 = vld [vmem:[%s0 + $0x18] sm:$0xff]
    %v75 = vld [vmem:[%s0 + $0x20] sm:$0xff]
    %v76 = vld [vmem:[%s0 + $0x28] sm:$0xf]
    %v77 = vld [vmem:[%s7] sm:$0xff]
    %v78 = vld [vmem:[%s7 + $0x8] sm:$0xff]
    %v79 = vld [vmem:[%s7 + $0x10] sm:$0xff]
    %v80 = vld [vmem:[%s7 + $0x18] sm:$0xff]
    %v81 = vld [vmem:[%s7 + $0x8] sm:$0xf]
    %v82 = vld [vmem:[%s1] sm:$0xff]
    %v83 = vld [vmem:[%s1 + $0x8] sm:$0xff]
    %v84 = vld [vmem:[%s1 + $0x10] sm:$0xff]
    %v85 = vld [vmem:[%s1 + $0x18] sm:$0xff]
    %87 = vset.pattern.permute.xlu0 0
    %88 = vperm.xlu0 %87, %v77
    %v89 = vpop.permute.xlu0 %88
    %92 = vset.pattern.permute.xlu0 0
    %93 = vperm.xlu0 %92, %v78
    %v94 = vpop.permute.xlu0 %93
    %97 = vset.pattern.permute.xlu0 0
    %98 = vperm.xlu0 %97, %v79
    %v99 = vpop.permute.xlu0 %98
    %102 = vset.pattern.permute.xlu0 0
    %103 = vperm.xlu0 %102, %v80
    %v104 = vpop.permute.xlu0 %103
    %vm106 = vcmask 261120
    %v108 = vsel %vm106, %v82, 0
    %v111 = vsel %vm106, %v83, 0
    %v114 = vsel %vm106, %v84, 0
    %v117 = vsel %vm106, %v85, 0
    %119 = vmatprep.subr.mxu0 0.0
    %120 = vmatpush1.msra.mxu0 %v71
    %121 = vmatprep.subr.mxu0 0.0
    %122 = vmatpush1.msra.mxu0 %v72
    %123 = vmatprep.subr.mxu0 0.0
    %124 = vmatpush1.msra.mxu0 %v73
    %125 = vmatprep.subr.mxu0 0.0
    %126 = vmatpush1.msra.mxu0 %v74
    %127 = vmatprep.subr.mxu0 0.0
    %128 = vmatpush1.msra.mxu0 0.0
    %129 = vmatprep.subr.mxu0 0.0
    %130 = vmatpush1.msra.mxu0 0.0
    %131 = vmatprep.subr.mxu0 0.0
    %132 = vmatpush1.msra.mxu0 0.0
    %133 = vmatprep.subr.mxu0 0.0
    %134 = vmatpush1.msra.mxu0 0.0
    %135 = vmatprep.subr.mxu0 0.0
    %136 = vmatpush1.msra.mxu0 0.0
    %137 = vmatprep.subr.mxu0 0.0
    %138 = vmatpush1.msra.mxu0 0.0
    %139 = vmatprep.subr.mxu0 0.0
    %140 = vmatpush1.msra.mxu0 0.0
    %141 = vmatprep.subr.mxu0 0.0
    %142 = vmatpush1.msra.mxu0 0.0
    %143 = vmatprep.subr.mxu0 0.0
    %144 = vmatpush1.msra.mxu0 0.0
    %145 = vmatprep.subr.mxu0 0.0
    %146 = vmatpush1.msra.mxu0 0.0
    %147 = vmatprep.subr.mxu0 0.0
    %148 = vmatpush1.msra.mxu0 0.0
    %149 = vmatprep.subr.mxu0 0.0
    %150 = vmatpush1.msra.mxu0 0.0
    %151 = vmatprep.subr.mxu0 0.0
    %152 = vmatpush1.msra.mxu0 0.0
    %153 = vmatprep.subr.mxu0 0.0
    %154 = vmatpush1.msra.mxu0 0.0
    %155 = vmatprep.subr.mxu0 0.0
    %156 = vmatpush1.msra.mxu0 0.0
    %157 = vmatprep.subr.mxu0 0.0
    %158 = vmatpush1.msra.mxu0 0.0
    %159 = vmatprep.subr.mxu0 0.0
    %160 = vmatpush1.msra.mxu0 0.0
    %161 = vmatprep.subr.mxu0 0.0
    %162 = vmatpush1.msra.mxu0 0.0
    %163 = vmatprep.subr.mxu0 0.0
    %164 = vmatpush1.msra.mxu0 0.0
    %165 = vmatprep.subr.mxu0 0.0
    %166 = vmatpush1.msra.mxu0 0.0
    %167 = vmatprep.subr.mxu0 0.0
    %168 = vmatpush1.msra.mxu0 0.0
    %169 = vmatprep.subr.mxu0 0.0
    %170 = vmatpush1.msra.mxu0 0.0
    %171 = vmatprep.subr.mxu0 0.0
    %172 = vmatpush1.msra.mxu0 0.0
    %173 = vmatprep.subr.mxu0 0.0
    %174 = vmatpush1.msra.mxu0 0.0
    %175 = vmatprep.subr.mxu0 0.0
    %176 = vmatpush1.msra.mxu0 0.0
    %177 = vmatprep.subr.mxu0 0.0
    %178 = vmatpush1.msra.mxu0 0.0
    %179 = vmatprep.subr.mxu0 0.0
    %180 = vmatpush1.msra.mxu0 0.0
    %181 = vmatprep.subr.mxu0 0.0
    %182 = vmatpush1.msra.mxu0 0.0
    %183 = vmatprep.mubr.f32.mxu0 0.0
    %184 = vmatmul.mubr.f32.gmra.mrb[0].mxu0 %v108
    %v185 = vpop.f32.mrb[0].mxu0
    %v186 = vadd.f32 %v89, %v185
    %v187 = vpop.f32.mrb[0].mxu0
    %188 = vmatprep.mubr.f32.mxu0 0.0
    %189 = vmatmul.mubr.f32.gmra.mrb[0].mxu0 %v111
    %v190 = vpop.f32.mrb[0].mxu0
    %v191 = vadd.f32 %v94, %v190
    %v192 = vpop.f32.mrb[0].mxu0
    %193 = vmatprep.mubr.f32.mxu0 0.0
    %194 = vmatmul.mubr.f32.gmra.mrb[0].mxu0 %v114
    %v195 = vpop.f32.mrb[0].mxu0
    %v196 = vadd.f32 %v99, %v195
    %v197 = vpop.f32.mrb[0].mxu0
    %198 = vmatprep.mubr.f32.mxu0 0.0
    %199 = vmatmul.mubr.f32.gmra.mrb[0].mxu0 %v117
    %v200 = vpop.f32.mrb[0].mxu0
    %v201 = vadd.f32 %v104, %v200
    %v202 = vpop.f32.mrb[0].mxu0
    %203 = vdwg.mxu0
    %v204 = vmax.f32 %v186, 0.0
    %v205 = vmax.f32 %v191, 0.0
    %v206 = vmax.f32 %v196, 0.0
    %v207 = vmax.f32 %v201, 0.0
    %v208 = vld [vmem:[#allocation2] sm:$0xff]
    %v209 = vld [vmem:[#allocation2 + $0x8] sm:$0xff]
    %v210 = vld [vmem:[#allocation2 + $0x10] sm:$0xff]
    %v211 = vld [vmem:[#allocation2 + $0x18] sm:$0xff]
    %212 = vset.pattern.permute.xlu0 1
    %213 = vperm.xlu0 %212, %v77
    %v214 = vpop.permute.xlu0 %213
    %216 = vset.pattern.permute.xlu0 1
    %217 = vperm.xlu0 %216, %v78
    %v218 = vpop.permute.xlu0 %217
    %220 = vset.pattern.permute.xlu0 1
    %221 = vperm.xlu0 %220, %v79
    %v222 = vpop.permute.xlu0 %221
    %224 = vset.pattern.permute.xlu0 1
    %225 = vperm.xlu0 %224, %v80
    %v226 = vpop.permute.xlu0 %225
    %v229 = vsel %vm106, %v208, 0
    %v232 = vsel %vm106, %v209, 0
    %v235 = vsel %vm106, %v210, 0
    %v238 = vsel %vm106, %v211, 0
    %240 = vmatprep.subr.mxu0 0.0
    %241 = vmatpush1.msra.mxu0 %v204
    %242 = vmatprep.subr.mxu0 0.0
    %243 = vmatpush1.msra.mxu0 %v205
    %244 = vmatprep.subr.mxu0 0.0
    %245 = vmatpush1.msra.mxu0 %v206
    %246 = vmatprep.subr.mxu0 0.0
    %247 = vmatpush1.msra.mxu0 %v207
    %248 = vmatprep.subr.mxu0 0.0
    %249 = vmatpush1.msra.mxu0 0.0
    %250 = vmatprep.subr.mxu0 0.0
    %251 = vmatpush1.msra.mxu0 0.0
    %252 = vmatprep.subr.mxu0 0.0
    %253 = vmatpush1.msra.mxu0 0.0
    %254 = vmatprep.subr.mxu0 0.0
    %255 = vmatpush1.msra.mxu0 0.0
    %256 = vmatprep.subr.mxu0 0.0
    %257 = vmatpush1.msra.mxu0 0.0
    %258 = vmatprep.subr.mxu0 0.0
    %259 = vmatpush1.msra.mxu0 0.0
    %260 = vmatprep.subr.mxu0 0.0
    %261 = vmatpush1.msra.mxu0 0.0
    %262 = vmatprep.subr.mxu0 0.0
    %263 = vmatpush1.msra.mxu0 0.0
    %264 = vmatprep.subr.mxu0 0.0
    %265 = vmatpush1.msra.mxu0 0.0
    %266 = vmatprep.subr.mxu0 0.0
    %267 = vmatpush1.msra.mxu0 0.0
    %268 = vmatprep.subr.mxu0 0.0
    %269 = vmatpush1.msra.mxu0 0.0
    %270 = vmatprep.subr.mxu0 0.0
    %271 = vmatpush1.msra.mxu0 0.0
    %272 = vmatprep.subr.mxu0 0.0
    %273 = vmatpush1.msra.mxu0 0.0
    %274 = vmatprep.subr.mxu0 0.0
    %275 = vmatpush1.msra.mxu0 0.0
    %276 = vmatprep.subr.mxu0 0.0
    %277 = vmatpush1.msra.mxu0 0.0
    %278 = vmatprep.subr.mxu0 0.0
    %279 = vmatpush1.msra.mxu0 0.0
    %280 = vmatprep.subr.mxu0 0.0
    %281 = vmatpush1.msra.mxu0 0.0
    %282 = vmatprep.subr.mxu0 0.0
    %283 = vmatpush1.msra.mxu0 0.0
    %284 = vmatprep.subr.mxu0 0.0
    %285 = vmatpush1.msra.mxu0 0.0
    %286 = vmatprep.subr.mxu0 0.0
    %287 = vmatpush1.msra.mxu0 0.0
    %288 = vmatprep.subr.mxu0 0.0
    %289 = vmatpush1.msra.mxu0 0.0
    %290 = vmatprep.subr.mxu0 0.0
    %291 = vmatpush1.msra.mxu0 0.0
    %292 = vmatprep.subr.mxu0 0.0
    %293 = vmatpush1.msra.mxu0 0.0
    %294 = vmatprep.subr.mxu0 0.0
    %295 = vmatpush1.msra.mxu0 0.0
    %296 = vmatprep.subr.mxu0 0.0
    %297 = vmatpush1.msra.mxu0 0.0
    %298 = vmatprep.subr.mxu0 0.0
    %299 = vmatpush1.msra.mxu0 0.0
    %300 = vmatprep.subr.mxu0 0.0
    %301 = vmatpush1.msra.mxu0 0.0
    %302 = vmatprep.subr.mxu0 0.0
    %303 = vmatpush1.msra.mxu0 0.0
    %304 = vmatprep.mubr.f32.mxu0 0.0
    %305 = vmatmul.mubr.f32.gmra.mrb[0].mxu0 %v229
    %v306 = vpop.f32.mrb[0].mxu0
    %v307 = vadd.f32 %v214, %v306
    %v308 = vpop.f32.mrb[0].mxu0
    %309 = vmatprep.mubr.f32.mxu0 0.0
    %310 = vmatmul.mubr.f32.gmra.mrb[0].mxu0 %v232
    %v311 = vpop.f32.mrb[0].mxu0
    %v312 = vadd.f32 %v218, %v311
    %v313 = vpop.f32.mrb[0].mxu0
    %314 = vmatprep.mubr.f32.mxu0 0.0
    %315 = vmatmul.mubr.f32.gmra.mrb[0].mxu0 %v235
    %v316 = vpop.f32.mrb[0].mxu0
    %v317 = vadd.f32 %v222, %v316
    %v318 = vpop.f32.mrb[0].mxu0
    %319 = vmatprep.mubr.f32.mxu0 0.0
    %320 = vmatmul.mubr.f32.gmra.mrb[0].mxu0 %v238
    %v321 = vpop.f32.mrb[0].mxu0
    %v322 = vadd.f32 %v226, %v321
    %v323 = vpop.f32.mrb[0].mxu0
    %324 = vdwg.mxu0
    %v325 = vmax.f32 %v307, 0.0
    %v326 = vmax.f32 %v312, 0.0
    %v327 = vmax.f32 %v317, 0.0
    %v328 = vmax.f32 %v322, 0.0
    %v329 = vld [vmem:[#allocation5] sm:$0xff]
    %v330 = vld [vmem:[#allocation5 + $0x8] sm:$0xff]
    %v331 = vld [vmem:[#allocation5 + $0x10] sm:$0xff]
    %v332 = vld [vmem:[#allocation5 + $0x18] sm:$0xff]
    %v333 = vld [vmem:[%s4] sm:$0xff]
    %v334 = vld [vmem:[%s4 + $0x8] sm:$0xff]
    %v335 = vld [vmem:[%s4 + $0x10] sm:$0xff]
    %v336 = vld [vmem:[%s4 + $0x18] sm:$0xff]
    %vm337 = vcmask 97280
    %v339 = vsel %vm337, %v333, 0
    %v342 = vsel %vm337, %v334, 0
    %v345 = vsel %vm337, %v335, 0
    %v348 = vsel %vm337, %v336, 0
    %vm350 = vcmask 1043456
    %v352 = vsel %vm350, %v76, 0
    %354 = vmatprep.subr.mxu0 0.0
    %355 = vmatpush1.msra.mxu0 %v75
    %356 = vmatprep.subr.mxu0 0.0
    %357 = vmatpush1.msra.mxu0 %v352
    %358 = vmatprep.subr.mxu0 0.0
    %359 = vmatpush1.msra.mxu0 0.0
    %360 = vmatprep.subr.mxu0 0.0
    %361 = vmatpush1.msra.mxu0 0.0
    %362 = vmatprep.subr.mxu0 0.0
    %363 = vmatpush1.msra.mxu0 0.0
    %364 = vmatprep.subr.mxu0 0.0
    %365 = vmatpush1.msra.mxu0 0.0
    %366 = vmatprep.subr.mxu0 0.0
    %367 = vmatpush1.msra.mxu0 0.0
    %368 = vmatprep.subr.mxu0 0.0
    %369 = vmatpush1.msra.mxu0 0.0
    %370 = vmatprep.subr.mxu0 0.0
    %371 = vmatpush1.msra.mxu0 0.0
    %372 = vmatprep.subr.mxu0 0.0
    %373 = vmatpush1.msra.mxu0 0.0
    %374 = vmatprep.subr.mxu0 0.0
    %375 = vmatpush1.msra.mxu0 0.0
    %376 = vmatprep.subr.mxu0 0.0
    %377 = vmatpush1.msra.mxu0 0.0
    %378 = vmatprep.subr.mxu0 0.0
    %379 = vmatpush1.msra.mxu0 0.0
    %380 = vmatprep.subr.mxu0 0.0
    %381 = vmatpush1.msra.mxu0 0.0
    %382 = vmatprep.subr.mxu0 0.0
    %383 = vmatpush1.msra.mxu0 0.0
    %384 = vmatprep.subr.mxu0 0.0
    %385 = vmatpush1.msra.mxu0 0.0
    %386 = vmatprep.subr.mxu0 0.0
    %387 = vmatpush1.msra.mxu0 0.0
    %388 = vmatprep.subr.mxu0 0.0
    %389 = vmatpush1.msra.mxu0 0.0
    %390 = vmatprep.subr.mxu0 0.0
    %391 = vmatpush1.msra.mxu0 0.0
    %392 = vmatprep.subr.mxu0 0.0
    %393 = vmatpush1.msra.mxu0 0.0
    %394 = vmatprep.subr.mxu0 0.0
    %395 = vmatpush1.msra.mxu0 0.0
    %396 = vmatprep.subr.mxu0 0.0
    %397 = vmatpush1.msra.mxu0 0.0
    %398 = vmatprep.subr.mxu0 0.0
    %399 = vmatpush1.msra.mxu0 0.0
    %400 = vmatprep.subr.mxu0 0.0
    %401 = vmatpush1.msra.mxu0 0.0
    %402 = vmatprep.subr.mxu0 0.0
    %403 = vmatpush1.msra.mxu0 0.0
    %404 = vmatprep.subr.mxu0 0.0
    %405 = vmatpush1.msra.mxu0 0.0
    %406 = vmatprep.subr.mxu0 0.0
    %407 = vmatpush1.msra.mxu0 0.0
    %408 = vmatprep.subr.mxu0 0.0
    %409 = vmatpush1.msra.mxu0 0.0
    %410 = vmatprep.subr.mxu0 0.0
    %411 = vmatpush1.msra.mxu0 0.0
    %412 = vmatprep.subr.mxu0 0.0
    %413 = vmatpush1.msra.mxu0 0.0
    %414 = vmatprep.subr.mxu0 0.0
    %415 = vmatpush1.msra.mxu0 0.0
    %416 = vmatprep.subr.mxu0 0.0
    %417 = vmatpush1.msra.mxu0 0.0
    %418 = vmatprep.mubr.f32.mxu0 0.0
    %419 = vmatmul.mubr.f32.gmra.mrb[0].mxu0 %v339
    %v420 = vpop.f32.mrb[0].mxu0
    %v421 = vadd.f32 0.0, %v420
    %v422 = vpop.f32.mrb[0].mxu0
    %423 = vmatprep.mubr.f32.mxu0 0.0
    %424 = vmatmul.mubr.f32.gmra.mrb[0].mxu0 %v342
    %v425 = vpop.f32.mrb[0].mxu0
    %v426 = vadd.f32 0.0, %v425
    %v427 = vpop.f32.mrb[0].mxu0
    %428 = vmatprep.mubr.f32.mxu0 0.0
    %429 = vmatmul.mubr.f32.gmra.mrb[0].mxu0 %v345
    %v430 = vpop.f32.mrb[0].mxu0
    %v431 = vadd.f32 0.0, %v430
    %v432 = vpop.f32.mrb[0].mxu0
    %433 = vmatprep.mubr.f32.mxu0 0.0
    %434 = vmatmul.mubr.f32.gmra.mrb[0].mxu0 %v348
    %v435 = vpop.f32.mrb[0].mxu0
    %v436 = vadd.f32 0.0, %v435
    %v437 = vpop.f32.mrb[0].mxu0
    %438 = vdwg.mxu0
    %v440 = vsel %vm106, %v329, 0
    %v443 = vsel %vm106, %v330, 0
    %v446 = vsel %vm106, %v331, 0
    %v449 = vsel %vm106, %v332, 0
    %451 = vmatprep.subr.mxu0 0.0
    %452 = vmatpush1.msra.mxu0 %v325
    %453 = vmatprep.subr.mxu0 0.0
    %454 = vmatpush1.msra.mxu0 %v326
    %455 = vmatprep.subr.mxu0 0.0
    %456 = vmatpush1.msra.mxu0 %v327
    %457 = vmatprep.subr.mxu0 0.0
    %458 = vmatpush1.msra.mxu0 %v328
    %459 = vmatprep.subr.mxu0 0.0
    %460 = vmatpush1.msra.mxu0 0.0
    %461 = vmatprep.subr.mxu0 0.0
    %462 = vmatpush1.msra.mxu0 0.0
    %463 = vmatprep.subr.mxu0 0.0
    %464 = vmatpush1.msra.mxu0 0.0
    %465 = vmatprep.subr.mxu0 0.0
    %466 = vmatpush1.msra.mxu0 0.0
    %467 = vmatprep.subr.mxu0 0.0
    %468 = vmatpush1.msra.mxu0 0.0
    %469 = vmatprep.subr.mxu0 0.0
    %470 = vmatpush1.msra.mxu0 0.0
    %471 = vmatprep.subr.mxu0 0.0
    %472 = vmatpush1.msra.mxu0 0.0
    %473 = vmatprep.subr.mxu0 0.0
    %474 = vmatpush1.msra.mxu0 0.0
    %475 = vmatprep.subr.mxu0 0.0
    %476 = vmatpush1.msra.mxu0 0.0
    %477 = vmatprep.subr.mxu0 0.0
    %478 = vmatpush1.msra.mxu0 0.0
    %479 = vmatprep.subr.mxu0 0.0
    %480 = vmatpush1.msra.mxu0 0.0
    %481 = vmatprep.subr.mxu0 0.0
    %482 = vmatpush1.msra.mxu0 0.0
    %483 = vmatprep.subr.mxu0 0.0
    %484 = vmatpush1.msra.mxu0 0.0
    %485 = vmatprep.subr.mxu0 0.0
    %486 = vmatpush1.msra.mxu0 0.0
    %487 = vmatprep.subr.mxu0 0.0
    %488 = vmatpush1.msra.mxu0 0.0
    %489 = vmatprep.subr.mxu0 0.0
    %490 = vmatpush1.msra.mxu0 0.0
    %491 = vmatprep.subr.mxu0 0.0
    %492 = vmatpush1.msra.mxu0 0.0
    %493 = vmatprep.subr.mxu0 0.0
    %494 = vmatpush1.msra.mxu0 0.0
    %495 = vmatprep.subr.mxu0 0.0
    %496 = vmatpush1.msra.mxu0 0.0
    %497 = vmatprep.subr.mxu0 0.0
    %498 = vmatpush1.msra.mxu0 0.0
    %499 = vmatprep.subr.mxu0 0.0
    %500 = vmatpush1.msra.mxu0 0.0
    %501 = vmatprep.subr.mxu0 0.0
    %502 = vmatpush1.msra.mxu0 0.0
    %503 = vmatprep.subr.mxu0 0.0
    %504 = vmatpush1.msra.mxu0 0.0
    %505 = vmatprep.subr.mxu0 0.0
    %506 = vmatpush1.msra.mxu0 0.0
    %507 = vmatprep.subr.mxu0 0.0
    %508 = vmatpush1.msra.mxu0 0.0
    %509 = vmatprep.subr.mxu0 0.0
    %510 = vmatpush1.msra.mxu0 0.0
    %511 = vmatprep.subr.mxu0 0.0
    %512 = vmatpush1.msra.mxu0 0.0
    %513 = vmatprep.subr.mxu0 0.0
    %514 = vmatpush1.msra.mxu0 0.0
    %515 = vmatprep.mubr.f32.mxu0 0.0
    %516 = vmatmul.mubr.f32.gmra.mrb[0].mxu0 %v440
    %v517 = vpop.f32.mrb[0].mxu0
    %v518 = vadd.f32 %v421, %v517
    %v519 = vpop.f32.mrb[0].mxu0
    %520 = vmatprep.mubr.f32.mxu0 0.0
    %521 = vmatmul.mubr.f32.gmra.mrb[0].mxu0 %v443
    %v522 = vpop.f32.mrb[0].mxu0
    %v523 = vadd.f32 %v426, %v522
    %v524 = vpop.f32.mrb[0].mxu0
    %525 = vmatprep.mubr.f32.mxu0 0.0
    %526 = vmatmul.mubr.f32.gmra.mrb[0].mxu0 %v446
    %v527 = vpop.f32.mrb[0].mxu0
    %v528 = vadd.f32 %v431, %v527
    %v529 = vpop.f32.mrb[0].mxu0
    %530 = vmatprep.mubr.f32.mxu0 0.0
    %531 = vmatmul.mubr.f32.gmra.mrb[0].mxu0 %v449
    %v532 = vpop.f32.mrb[0].mxu0
    %v533 = vadd.f32 %v436, %v532
    %v534 = vpop.f32.mrb[0].mxu0
    %535 = vdwg.mxu0
    %536 = vset.pattern.permute.xlu0 2
    %537 = vperm.xlu0 %536, %v77
    %v538 = vpop.permute.xlu0 %537
    %540 = vset.pattern.permute.xlu0 2
    %541 = vperm.xlu0 %540, %v78
    %v542 = vpop.permute.xlu0 %541
    %544 = vset.pattern.permute.xlu0 2
    %545 = vperm.xlu0 %544, %v79
    %v546 = vpop.permute.xlu0 %545
    %548 = vset.pattern.permute.xlu0 2
    %549 = vperm.xlu0 %548, %v80
    %v550 = vpop.permute.xlu0 %549
    %v552 = vadd.f32 %v518, %v538
    %v553 = vadd.f32 %v523, %v542
    %v554 = vadd.f32 %v528, %v546
    %v555 = vadd.f32 %v533, %v550
    %v556 = vmax.f32 %v552, 0.0
    %v557 = vmax.f32 %v553, 0.0
    %v558 = vmax.f32 %v554, 0.0
    %v559 = vmax.f32 %v555, 0.0
    %v560 = vld [vmem:[#allocation7] sm:$0xff]
    %v561 = vld [vmem:[#allocation7 + $0x8] sm:$0xff]
    %v562 = vld [vmem:[#allocation7 + $0x10] sm:$0xff]
    %v563 = vld [vmem:[#allocation7 + $0x18] sm:$0xff]
    %564 = vset.pattern.permute.xlu0 3
    %565 = vperm.xlu0 %564, %v77
    %v566 = vpop.permute.xlu0 %565
    %568 = vset.pattern.permute.xlu0 3
    %569 = vperm.xlu0 %568, %v78
    %v570 = vpop.permute.xlu0 %569
    %572 = vset.pattern.permute.xlu0 3
    %573 = vperm.xlu0 %572, %v79
    %v574 = vpop.permute.xlu0 %573
    %576 = vset.pattern.permute.xlu0 3
    %577 = vperm.xlu0 %576, %v80
    %v578 = vpop.permute.xlu0 %577
    %v581 = vsel %vm106, %v560, 0
    %v584 = vsel %vm106, %v561, 0
    %v587 = vsel %vm106, %v562, 0
    %v590 = vsel %vm106, %v563, 0
    %592 = vmatprep.subr.mxu0 0.0
    %593 = vmatpush1.msra.mxu0 %v556
    %594 = vmatprep.subr.mxu0 0.0
    %595 = vmatpush1.msra.mxu0 %v557
    %596 = vmatprep.subr.mxu0 0.0
    %597 = vmatpush1.msra.mxu0 %v558
    %598 = vmatprep.subr.mxu0 0.0
    %599 = vmatpush1.msra.mxu0 %v559
    %600 = vmatprep.subr.mxu0 0.0
    %601 = vmatpush1.msra.mxu0 0.0
    %602 = vmatprep.subr.mxu0 0.0
    %603 = vmatpush1.msra.mxu0 0.0
    %604 = vmatprep.subr.mxu0 0.0
    %605 = vmatpush1.msra.mxu0 0.0
    %606 = vmatprep.subr.mxu0 0.0
    %607 = vmatpush1.msra.mxu0 0.0
    %608 = vmatprep.subr.mxu0 0.0
    %609 = vmatpush1.msra.mxu0 0.0
    %610 = vmatprep.subr.mxu0 0.0
    %611 = vmatpush1.msra.mxu0 0.0
    %612 = vmatprep.subr.mxu0 0.0
    %613 = vmatpush1.msra.mxu0 0.0
    %614 = vmatprep.subr.mxu0 0.0
    %615 = vmatpush1.msra.mxu0 0.0
    %616 = vmatprep.subr.mxu0 0.0
    %617 = vmatpush1.msra.mxu0 0.0
    %618 = vmatprep.subr.mxu0 0.0
    %619 = vmatpush1.msra.mxu0 0.0
    %620 = vmatprep.subr.mxu0 0.0
    %621 = vmatpush1.msra.mxu0 0.0
    %622 = vmatprep.subr.mxu0 0.0
    %623 = vmatpush1.msra.mxu0 0.0
    %624 = vmatprep.subr.mxu0 0.0
    %625 = vmatpush1.msra.mxu0 0.0
    %626 = vmatprep.subr.mxu0 0.0
    %627 = vmatpush1.msra.mxu0 0.0
    %628 = vmatprep.subr.mxu0 0.0
    %629 = vmatpush1.msra.mxu0 0.0
    %630 = vmatprep.subr.mxu0 0.0
    %631 = vmatpush1.msra.mxu0 0.0
    %632 = vmatprep.subr.mxu0 0.0
    %633 = vmatpush1.msra.mxu0 0.0
    %634 = vmatprep.subr.mxu0 0.0
    %635 = vmatpush1.msra.mxu0 0.0
    %636 = vmatprep.subr.mxu0 0.0
    %637 = vmatpush1.msra.mxu0 0.0
    %638 = vmatprep.subr.mxu0 0.0
    %639 = vmatpush1.msra.mxu0 0.0
    %640 = vmatprep.subr.mxu0 0.0
    %641 = vmatpush1.msra.mxu0 0.0
    %642 = vmatprep.subr.mxu0 0.0
    %643 = vmatpush1.msra.mxu0 0.0
    %644 = vmatprep.subr.mxu0 0.0
    %645 = vmatpush1.msra.mxu0 0.0
    %646 = vmatprep.subr.mxu0 0.0
    %647 = vmatpush1.msra.mxu0 0.0
    %648 = vmatprep.subr.mxu0 0.0
    %649 = vmatpush1.msra.mxu0 0.0
    %650 = vmatprep.subr.mxu0 0.0
    %651 = vmatpush1.msra.mxu0 0.0
    %652 = vmatprep.subr.mxu0 0.0
    %653 = vmatpush1.msra.mxu0 0.0
    %654 = vmatprep.subr.mxu0 0.0
    %655 = vmatpush1.msra.mxu0 0.0
    %656 = vmatprep.mubr.f32.mxu0 0.0
    %657 = vmatmul.mubr.f32.gmra.mrb[0].mxu0 %v581
    %v658 = vpop.f32.mrb[0].mxu0
    %v659 = vadd.f32 %v566, %v658
    %v660 = vpop.f32.mrb[0].mxu0
    %661 = vmatprep.mubr.f32.mxu0 0.0
    %662 = vmatmul.mubr.f32.gmra.mrb[0].mxu0 %v584
    %v663 = vpop.f32.mrb[0].mxu0
    %v664 = vadd.f32 %v570, %v663
    %v665 = vpop.f32.mrb[0].mxu0
    %666 = vmatprep.mubr.f32.mxu0 0.0
    %667 = vmatmul.mubr.f32.gmra.mrb[0].mxu0 %v587
    %v668 = vpop.f32.mrb[0].mxu0
    %v669 = vadd.f32 %v574, %v668
    %v670 = vpop.f32.mrb[0].mxu0
    %671 = vmatprep.mubr.f32.mxu0 0.0
    %672 = vmatmul.mubr.f32.gmra.mrb[0].mxu0 %v590
    %v673 = vpop.f32.mrb[0].mxu0
    %v674 = vadd.f32 %v578, %v673
    %v675 = vpop.f32.mrb[0].mxu0
    %676 = vdwg.mxu0
    %v677 = vmax.f32 %v659, 0.0
    %v678 = vmax.f32 %v664, 0.0
    %v679 = vmax.f32 %v669, 0.0
    %v680 = vmax.f32 %v674, 0.0
    %v681 = vld [vmem:[%s6] sm:$0xff]
    %v682 = vld [vmem:[%s6 + $0x8] sm:$0xf]
    %683 = vset.pattern.permute.xlu0 4
    %684 = vperm.xlu0 %683, %v77
    %v685 = vpop.permute.xlu0 %684
    %688 = vset.pattern.permute.xlu0 4
    %689 = vperm.xlu0 %688, %v81
    %v690 = vpop.permute.xlu0 %689
    %v693 = vsel %vm106, %v681, 0
    %v696 = vsel %vm106, %v682, 0
    %698 = vmatprep.subr.mxu0 0.0
    %699 = vmatpush1.msra.mxu0 %v677
    %700 = vmatprep.subr.mxu0 0.0
    %701 = vmatpush1.msra.mxu0 %v678
    %702 = vmatprep.subr.mxu0 0.0
    %703 = vmatpush1.msra.mxu0 %v679
    %704 = vmatprep.subr.mxu0 0.0
    %705 = vmatpush1.msra.mxu0 %v680
    %706 = vmatprep.subr.mxu0 0.0
    %707 = vmatpush1.msra.mxu0 0.0
    %708 = vmatprep.subr.mxu0 0.0
    %709 = vmatpush1.msra.mxu0 0.0
    %710 = vmatprep.subr.mxu0 0.0
    %711 = vmatpush1.msra.mxu0 0.0
    %712 = vmatprep.subr.mxu0 0.0
    %713 = vmatpush1.msra.mxu0 0.0
    %714 = vmatprep.subr.mxu0 0.0
    %715 = vmatpush1.msra.mxu0 0.0
    %716 = vmatprep.subr.mxu0 0.0
    %717 = vmatpush1.msra.mxu0 0.0
    %718 = vmatprep.subr.mxu0 0.0
    %719 = vmatpush1.msra.mxu0 0.0
    %720 = vmatprep.subr.mxu0 0.0
    %721 = vmatpush1.msra.mxu0 0.0
    %722 = vmatprep.subr.mxu0 0.0
    %723 = vmatpush1.msra.mxu0 0.0
    %724 = vmatprep.subr.mxu0 0.0
    %725 = vmatpush1.msra.mxu0 0.0
    %726 = vmatprep.subr.mxu0 0.0
    %727 = vmatpush1.msra.mxu0 0.0
    %728 = vmatprep.subr.mxu0 0.0
    %729 = vmatpush1.msra.mxu0 0.0
    %730 = vmatprep.subr.mxu0 0.0
    %731 = vmatpush1.msra.mxu0 0.0
    %732 = vmatprep.subr.mxu0 0.0
    %733 = vmatpush1.msra.mxu0 0.0
    %734 = vmatprep.subr.mxu0 0.0
    %735 = vmatpush1.msra.mxu0 0.0
    %736 = vmatprep.subr.mxu0 0.0
    %737 = vmatpush1.msra.mxu0 0.0
    %738 = vmatprep.subr.mxu0 0.0
    %739 = vmatpush1.msra.mxu0 0.0
    %740 = vmatprep.subr.mxu0 0.0
    %741 = vmatpush1.msra.mxu0 0.0
    %742 = vmatprep.subr.mxu0 0.0
    %743 = vmatpush1.msra.mxu0 0.0
    %744 = vmatprep.subr.mxu0 0.0
    %745 = vmatpush1.msra.mxu0 0.0
    %746 = vmatprep.subr.mxu0 0.0
    %747 = vmatpush1.msra.mxu0 0.0
    %748 = vmatprep.subr.mxu0 0.0
    %749 = vmatpush1.msra.mxu0 0.0
    %750 = vmatprep.subr.mxu0 0.0
    %751 = vmatpush1.msra.mxu0 0.0
    %752 = vmatprep.subr.mxu0 0.0
    %753 = vmatpush1.msra.mxu0 0.0
    %754 = vmatprep.subr.mxu0 0.0
    %755 = vmatpush1.msra.mxu0 0.0
    %756 = vmatprep.subr.mxu0 0.0
    %757 = vmatpush1.msra.mxu0 0.0
    %758 = vmatprep.subr.mxu0 0.0
    %759 = vmatpush1.msra.mxu0 0.0
    %760 = vmatprep.subr.mxu0 0.0
    %761 = vmatpush1.msra.mxu0 0.0
    %762 = vmatprep.mubr.f32.mxu0 0.0
    %763 = vmatmul.mubr.f32.gmra.mrb[0].mxu0 %v693
    %v764 = vpop.f32.mrb[0].mxu0
    %v765 = vadd.f32 %v685, %v764
    %v766 = vpop.f32.mrb[0].mxu0
    %767 = vmatprep.mubr.f32.mxu0 0.0
    %768 = vmatmul.mubr.f32.gmra.mrb[0].mxu0 %v696
    %v769 = vpop.f32.mrb[0].mxu0
    %v770 = vadd.f32 %v690, %v769
    %v771 = vpop.f32.mrb[0].mxu0
    %772 = vdwg.mxu0
    %773 = vst [vmem:[#allocation8] sm:$0xff] %v765
    %774 = vst [vmem:[#allocation8 + $0x8] sm:$0xf] %v770
    // Predicated region
    $region46: #{tpu_custom_call.1} parent=1 // pred_check
      _
    $region47: #{tpu_custom_call.1} parent=1 // pred_check_branch
      %776 = sbr.rel (0) target = $region49
    $region48: #{tpu_custom_call.1} parent=1 // pred_region
      %s778 = ssub.s32 256, 256
      %779 = vsyncadd [#allocation4], %s778
      %s780 = sshll.u32 [#allocation8], 4
      %s781 = int_to_ptr.vmem [resolvable:$true] %s780
      %786 = dma.vmem_to_hbm [thread:$0]  %s781, 256, %s8, [#allocation4], 128, 128, 8
    $region49: #{tpu_custom_call.1} parent=1 // pred_fallthru
      _
    // Predicated region
    $region50: #{tpu_custom_call.1} parent=1 // pred_check
      _
    $region51: #{tpu_custom_call.1} parent=1 // pred_check_branch
      %788 = sbr.rel (0) target = $region53
    $region52: #{tpu_custom_call.1} parent=1 // pred_region
      %789 = dma.done [#allocation4], 256
    $region53: #{tpu_custom_call.1} parent=1 // pred_fallthru
      _
    %790 = vsyncpa [#allocation3], 1
    %791 = vsyncpa [#allocation6], 1
    %792 = vsyncpa [#allocation4], 1

</llo_original>
